<compile_context>
chip_gen: v7x
topology: tpu7x:2x2x1
jax: 0.10.0
libtpu: 0.0.40
codegen_flags: <defaults>
</compile_context>

<pallas_src>
import jax
import jax.numpy as jnp
from jax.experimental import pallas as pl
from jax.experimental.pallas import tpu as pltpu

LANES = 128
MAX_BLOCK_ROWS = 1024   # (1024,128) f32 tile = 512 KiB per input buffer
NUM_CORES = 2           # leading "parallel" grid axis (v7x megacore)


def _make_kernel(rows, block_rows, blocks_per_core, needs_mask):
    def kernel(x_ref, t_ref, oc_ref, op_ref, c_acc, p_acc):
        i = pl.program_id(1)

        @pl.when(i == 0)
        def _init():
            c_acc[...] = jnp.zeros_like(c_acc)
            p_acc[...] = jnp.zeros_like(p_acc)

        x = x_ref[...].astype(jnp.float32)
        t = t_ref[...].astype(jnp.float32)

        # Elementwise hot path (VPU only): clip -> round
        # (round-half-to-even, matching torch.round).
        correct = jnp.round(jnp.clip(x * t, 0.0, 1.0))
        predicted = jnp.round(jnp.clip(x, 0.0, 1.0))

        if needs_mask:
            # Mask rows past the end of the real input. `g` is the UNCLAMPED
            # global row-block index, so duplicate / out-of-range blocks fed to
            # an over-provisioned core contribute exactly zero.
            g = pl.program_id(0) * blocks_per_core + i
            valid_rows = rows - g * block_rows
            row_ids = jax.lax.broadcasted_iota(jnp.int32, (block_rows, LANES), 0)
            keep = row_ids < valid_rows
            correct = jnp.where(keep, correct, 0.0)
            predicted = jnp.where(keep, predicted, 0.0)

        c_acc[...] += correct
        p_acc[...] += predicted

        # Single cross-sublane reduction at the very end (XLU used once per
        # core, not once per block). Cross-lane + cross-core reduce and the
        # divide are done in the wrapper on a tiny (NUM_CORES, 1, 128) array.
        @pl.when(i == blocks_per_core - 1)
        def _finalize():
            oc_ref[...] = jnp.sum(c_acc[...], axis=0, keepdims=True).reshape(
                1, 1, LANES)
            op_ref[...] = jnp.sum(p_acc[...], axis=0, keepdims=True).reshape(
                1, 1, LANES)

    return kernel


def precision(inputs, targets):
    """Pallas TPU equivalent of Precision.forward. Returns a float32 scalar.

    Note: like the PyTorch reference, returns inf/nan if predicted == 0.
    """
    x = jnp.ravel(inputs)
    t = jnp.ravel(targets)
    assert x.shape == t.shape, "inputs and targets must have the same #elements"
    n = x.shape[0]

    # Only a sub-128-element tail is ever padded (zeros contribute nothing to
    # either sum); no wrapper-side astype — the kernel casts per block.
    rem = n % LANES
    if rem:
        x = jnp.pad(x, (0, LANES - rem))
        t = jnp.pad(t, (0, LANES - rem))
    rows = x.shape[0] // LANES
    x2 = x.reshape(rows, LANES)
    t2 = t.reshape(rows, LANES)

    # Adaptive block: big for large inputs, sublane-aligned full extent for
    # small ones (avoids blocks wildly larger than the array).
    block_rows = min(MAX_BLOCK_ROWS, ((rows + 7) // 8) * 8)
    total_blocks = pl.cdiv(rows, block_rows)
    blocks_per_core = pl.cdiv(total_blocks, NUM_CORES)
    clamp = NUM_CORES * blocks_per_core > total_blocks          # static
    needs_mask = NUM_CORES * blocks_per_core * block_rows != rows  # static

    def in_map(c, i):
        g = c * blocks_per_core + i
        if clamp:  # keep the DMA in bounds; the kernel masks the duplicate
            g = jnp.minimum(g, total_blocks - 1)
        return (g, 0)

    kernel = _make_kernel(rows, block_rows, blocks_per_core, needs_mask)

    out_c, out_p = pl.pallas_call(
        kernel,
        out_shape=(
            jax.ShapeDtypeStruct((NUM_CORES, 1, LANES), jnp.float32),
            jax.ShapeDtypeStruct((NUM_CORES, 1, LANES), jnp.float32),
        ),
        grid_spec=pltpu.PrefetchScalarGridSpec(
            num_scalar_prefetch=0,
            grid=(NUM_CORES, blocks_per_core),
            in_specs=[
                pl.BlockSpec((block_rows, LANES), in_map),
                pl.BlockSpec((block_rows, LANES), in_map),
            ],
            out_specs=[
                pl.BlockSpec((1, 1, LANES), lambda c, i: (c, 0, 0)),
                pl.BlockSpec((1, 1, LANES), lambda c, i: (c, 0, 0)),
            ],
            scratch_shapes=[
                pltpu.VMEM((block_rows, LANES), jnp.float32),  # correct acc
                pltpu.VMEM((block_rows, LANES), jnp.float32),  # predicted acc
            ],
        ),
        compiler_params=pltpu.CompilerParams(
            dimension_semantics=("parallel", "arbitrary"),
        ),
    )(x2, t2)

    correct = jnp.sum(out_c)
    predicted = jnp.sum(out_p)
    return correct / predicted


def _precision_ref(inputs, targets):
    x = jnp.ravel(inputs).astype(jnp.float32)
    t = jnp.ravel(targets).astype(jnp.float32)
    correct = jnp.sum(jnp.round(jnp.clip(x * t, 0.0, 1.0)))
    predicted = jnp.sum(jnp.round(jnp.clip(x, 0.0, 1.0)))
    return correct / predicted


if __name__ == "__main__":
    key = jax.random.PRNGKey(0)
    k1, k2 = jax.random.split(key)

    # Small shapes consistent with a segmentation-style precision metric.
    shape = (2, 4, 16, 16)  # NCHW-like; flattened inside anyway
    inputs = jax.random.uniform(k1, shape, dtype=jnp.float32)            # "probabilities"
    targets = (jax.random.uniform(k2, shape) > 0.5).astype(jnp.float32)  # binary mask

    result = jax.block_until_ready(precision(inputs, targets))
    expected = jax.block_until_ready(_precision_ref(inputs, targets))
    assert jnp.allclose(result, expected, rtol=1e-6, atol=1e-6), (result, expected)

    print("KERNEL_OK")
</pallas_src>

<mosaic_0001>
module attributes {stable_mosaic.version = 11 : i64} {
  func.func @kernel(%arg0: i32, %arg1: i32, %arg2: memref<16x128xf32, #tpu.memory_space<vmem>>, %arg3: memref<16x128xf32, #tpu.memory_space<vmem>>, %arg4: memref<1x1x128xf32, #tpu.memory_space<vmem>>, %arg5: memref<1x1x128xf32, #tpu.memory_space<vmem>>, %arg6: memref<16x128xf32, #tpu.memory_space<vmem>>, %arg7: memref<16x128xf32, #tpu.memory_space<vmem>>) attributes {dimension_semantics = [#tpu.dimension_semantics<parallel>, #tpu.dimension_semantics<arbitrary>], iteration_bounds = array<i64: 2, 1>, scalar_prefetch = 0 : i64, scratch_operands = 2 : i64, tpu.core_type = #tpu.core_type<tc>, window_params = [{transform_indices = @transform_0, window_bounds = array<i64: 16, 128>}, {transform_indices = @transform_1, window_bounds = array<i64: 16, 128>}, {transform_indices = @transform_2, window_bounds = array<i64: 1, 1, 128>}, {transform_indices = @transform_3, window_bounds = array<i64: 1, 1, 128>}]} {
    %c0_i32 = arith.constant 0 : i32
    %0 = arith.cmpi eq, %arg1, %c0_i32 : i32
    %1 = arith.extui %0 : i1 to i32
    %c0_i32_0 = arith.constant 0 : i32
    %2 = arith.cmpi ne, %1, %c0_i32_0 : i32
    scf.if %2 {
      %cst_20 = arith.constant 0.000000e+00 : f32
      %36 = vector.broadcast %cst_20 : f32 to vector<16x128xf32>
      %c0_21 = arith.constant 0 : index
      %c0_22 = arith.constant 0 : index
      %37 = vector.load %arg6[%c0_21, %c0_22] : memref<16x128xf32, #tpu.memory_space<vmem>>, vector<16x128xf32>
      tpu.vector_store %arg6[%c0_21, %c0_22], %36 {strides = array<i32>} : memref<16x128xf32, #tpu.memory_space<vmem>>, vector<16x128xf32>,
      %cst_23 = arith.constant 0.000000e+00 : f32
      %38 = vector.broadcast %cst_23 : f32 to vector<16x128xf32>
      %c0_24 = arith.constant 0 : index
      %c0_25 = arith.constant 0 : index
      %39 = vector.load %arg7[%c0_24, %c0_25] : memref<16x128xf32, #tpu.memory_space<vmem>>, vector<16x128xf32>
      tpu.vector_store %arg7[%c0_24, %c0_25], %38 {strides = array<i32>} : memref<16x128xf32, #tpu.memory_space<vmem>>, vector<16x128xf32>,
    } else {
    }
    %c0 = arith.constant 0 : index
    %c0_1 = arith.constant 0 : index
    %3 = vector.load %arg2[%c0, %c0_1] : memref<16x128xf32, #tpu.memory_space<vmem>>, vector<16x128xf32>
    %c0_2 = arith.constant 0 : index
    %c0_3 = arith.constant 0 : index
    %4 = vector.load %arg3[%c0_2, %c0_3] : memref<16x128xf32, #tpu.memory_space<vmem>>, vector<16x128xf32>
    %5 = arith.mulf %3, %4 : vector<16x128xf32>
    %cst = arith.constant 0.000000e+00 : f32
    %cst_4 = arith.constant 1.000000e+00 : f32
    %6 = vector.broadcast %cst : f32 to vector<16x128xf32>
    %7 = arith.maximumf %6, %5 : vector<16x128xf32>
    %8 = vector.broadcast %cst_4 : f32 to vector<16x128xf32>
    %9 = arith.minimumf %8, %7 : vector<16x128xf32>
    %10 = math.roundeven %9 : vector<16x128xf32>
    %cst_5 = arith.constant 0.000000e+00 : f32
    %cst_6 = arith.constant 1.000000e+00 : f32
    %11 = vector.broadcast %cst_5 : f32 to vector<16x128xf32>
    %12 = arith.maximumf %11, %3 : vector<16x128xf32>
    %13 = vector.broadcast %cst_6 : f32 to vector<16x128xf32>
    %14 = arith.minimumf %13, %12 : vector<16x128xf32>
    %15 = math.roundeven %14 : vector<16x128xf32>
    %c1_i32 = arith.constant 1 : i32
    %16 = arith.muli %arg0, %c1_i32 : i32
    %17 = arith.addi %16, %arg1 : i32
    %c16_i32 = arith.constant 16 : i32
    %18 = arith.muli %17, %c16_i32 : i32
    %c16_i32_7 = arith.constant 16 : i32
    %19 = arith.subi %c16_i32_7, %18 : i32
    %20 = tpu.iota {dimensions = array<i32: 0>} : vector<16x128xi32>
    %21 = vector.broadcast %19 : i32 to vector<16x128xi32>
    %22 = arith.cmpi slt, %20, %21 : vector<16x128xi32>
    %cst_8 = arith.constant 0.000000e+00 : f32
    %23 = vector.broadcast %cst_8 : f32 to vector<16x128xf32>
    %24 = arith.select %22, %10, %23 : vector<16x128xi1>, vector<16x128xf32>
    %cst_9 = arith.constant 0.000000e+00 : f32
    %25 = vector.broadcast %cst_9 : f32 to vector<16x128xf32>
    %26 = arith.select %22, %15, %25 : vector<16x128xi1>, vector<16x128xf32>
    %c0_10 = arith.constant 0 : index
    %c0_11 = arith.constant 0 : index
    %27 = vector.load %arg6[%c0_10, %c0_11] : memref<16x128xf32, #tpu.memory_space<vmem>>, vector<16x128xf32>
    %28 = arith.addf %27, %24 : vector<16x128xf32>
    %c0_12 = arith.constant 0 : index
    %c0_13 = arith.constant 0 : index
    %29 = vector.load %arg6[%c0_12, %c0_13] : memref<16x128xf32, #tpu.memory_space<vmem>>, vector<16x128xf32>
    tpu.vector_store %arg6[%c0_12, %c0_13], %28 {strides = array<i32>} : memref<16x128xf32, #tpu.memory_space<vmem>>, vector<16x128xf32>,
    %c0_14 = arith.constant 0 : index
    %c0_15 = arith.constant 0 : index
    %30 = vector.load %arg7[%c0_14, %c0_15] : memref<16x128xf32, #tpu.memory_space<vmem>>, vector<16x128xf32>
    %31 = arith.addf %30, %26 : vector<16x128xf32>
    %c0_16 = arith.constant 0 : index
    %c0_17 = arith.constant 0 : index
    %32 = vector.load %arg7[%c0_16, %c0_17] : memref<16x128xf32, #tpu.memory_space<vmem>>, vector<16x128xf32>
    tpu.vector_store %arg7[%c0_16, %c0_17], %31 {strides = array<i32>} : memref<16x128xf32, #tpu.memory_space<vmem>>, vector<16x128xf32>,
    %c0_i32_18 = arith.constant 0 : i32
    %33 = arith.cmpi eq, %arg1, %c0_i32_18 : i32
    %34 = arith.extui %33 : i1 to i32
    %c0_i32_19 = arith.constant 0 : i32
    %35 = arith.cmpi ne, %34, %c0_i32_19 : i32
    scf.if %35 {
      %c0_20 = arith.constant 0 : index
      %c0_21 = arith.constant 0 : index
      %36 = vector.load %arg6[%c0_20, %c0_21] : memref<16x128xf32, #tpu.memory_space<vmem>>, vector<16x128xf32>
      %cst_22 = arith.constant dense<0.000000e+00> : vector<128xf32>
      %37 = vector.multi_reduction <add>, %36, %cst_22 [0] : vector<16x128xf32> to vector<128xf32>
      %38 = vector.shape_cast %37 : vector<128xf32> to vector<1x128xf32>
      %39 = vector.shape_cast %38 : vector<1x128xf32> to vector<1x1x128xf32>
      %c0_23 = arith.constant 0 : index
      %c0_24 = arith.constant 0 : index
      %c0_25 = arith.constant 0 : index
      %40 = vector.load %arg4[%c0_23, %c0_24, %c0_25] : memref<1x1x128xf32, #tpu.memory_space<vmem>>, vector<1x1x128xf32>
      tpu.vector_store %arg4[%c0_23, %c0_24, %c0_25], %39 {strides = array<i32>} : memref<1x1x128xf32, #tpu.memory_space<vmem>>, vector<1x1x128xf32>,
      %c0_26 = arith.constant 0 : index
      %c0_27 = arith.constant 0 : index
      %41 = vector.load %arg7[%c0_26, %c0_27] : memref<16x128xf32, #tpu.memory_space<vmem>>, vector<16x128xf32>
      %cst_28 = arith.constant dense<0.000000e+00> : vector<128xf32>
      %42 = vector.multi_reduction <add>, %41, %cst_28 [0] : vector<16x128xf32> to vector<128xf32>
      %43 = vector.shape_cast %42 : vector<128xf32> to vector<1x128xf32>
      %44 = vector.shape_cast %43 : vector<1x128xf32> to vector<1x1x128xf32>
      %c0_29 = arith.constant 0 : index
      %c0_30 = arith.constant 0 : index
      %c0_31 = arith.constant 0 : index
      %45 = vector.load %arg5[%c0_29, %c0_30, %c0_31] : memref<1x1x128xf32, #tpu.memory_space<vmem>>, vector<1x1x128xf32>
      tpu.vector_store %arg5[%c0_29, %c0_30, %c0_31], %44 {strides = array<i32>} : memref<1x1x128xf32, #tpu.memory_space<vmem>>, vector<1x1x128xf32>,
    } else {
    }
    return
  }
  func.func @transform_0(%arg0: i32, %arg1: i32) -> (i32, i32) {
    %c1_i32 = arith.constant 1 : i32
    %0 = arith.muli %arg0, %c1_i32 : i32
    %1 = arith.addi %0, %arg1 : i32
    %c0_i32 = arith.constant 0 : i32
    %2 = arith.minsi %1, %c0_i32 : i32
    %c0_i32_0 = arith.constant 0 : i32
    %c0_i32_1 = arith.constant 0 : i32
    return %2, %c0_i32_0 : i32, i32
  }
  func.func @transform_1(%arg0: i32, %arg1: i32) -> (i32, i32) {
    %c1_i32 = arith.constant 1 : i32
    %0 = arith.muli %arg0, %c1_i32 : i32
    %1 = arith.addi %0, %arg1 : i32
    %c0_i32 = arith.constant 0 : i32
    %2 = arith.minsi %1, %c0_i32 : i32
    %c0_i32_0 = arith.constant 0 : i32
    %c0_i32_1 = arith.constant 0 : i32
    return %2, %c0_i32_0 : i32, i32
  }
  func.func @transform_2(%arg0: i32, %arg1: i32) -> (i32, i32, i32) {
    %c0_i32 = arith.constant 0 : i32
    %c0_i32_0 = arith.constant 0 : i32
    %c0_i32_1 = arith.constant 0 : i32
    return %arg0, %c0_i32, %c0_i32_0 : i32, i32, i32
  }
  func.func @transform_3(%arg0: i32, %arg1: i32) -> (i32, i32, i32) {
    %c0_i32 = arith.constant 0 : i32
    %c0_i32_0 = arith.constant 0 : i32
    %c0_i32_1 = arith.constant 0 : i32
    return %arg0, %c0_i32, %c0_i32_0 : i32, i32, i32
  }
}

</mosaic_0001>

<llo_original>
// kernel: tpu_custom_call.1
$region0: #{tpu_custom_call.1}
  #allocation0 [shape = 'u32[]', space=smem, size = 0x4, offset = 0x4, fixed_abs, tag = 'smem constant byte address 0x4 - core index']
  #allocation1 [shape = 'u32[144,128]{1,0:T(1,128)}', space=vmem, size = 0x12000, scoped, tag = 'internal scratch']
  #allocation2 [shape = 'f32[16,128]{1,0:T(8,128)}', space=vmem, size = 0x2000, scoped, tag = 'scratch operand']
  #allocation3 [shape = 'f32[16,128]{1,0:T(8,128)}', space=vmem, size = 0x2000, scoped, tag = 'scratch operand']
  %s0 = inlined_call_operand.hbm [shape: f32[16,128], index: 0, kind: input, shape index: {}]
  %s1 = inlined_call_operand.hbm [shape: f32[16,128], index: 1, kind: input, shape index: {}]
  %s2 = inlined_call_operand.hbm [shape: f32[2,1,128], index: 2, kind: output, shape index: {0}]
  %s3 = inlined_call_operand.hbm [shape: f32[2,1,128], index: 3, kind: output, shape index: {1}]
  %4 = xla_tuple %s2, %s3
  %s5 = sld [smem:[#allocation0]]
  $region65: #{tpu_custom_call.1} parent=0
    _
  %s7 = ssub.s32 1, %s5
  %s8 = scalar_select 0, %s7, %s5
  $region1: #{tpu_custom_call.1} parent=0
    #allocation4 [shape = 'u8[16384]{0}', space=vmem, size = 0x4000, scoped, tag = 'input window, operand 0']
    #allocation5 [shape = 's32[2]{0}', space=sflag, size = 0x8, scoped, tag = 'scoped memory for tpu_custom_call.1']
    #allocation6 [shape = 's32[2]{0}', space=sflag, size = 0x8, scoped, tag = 'scoped memory for tpu_custom_call.1']
    #allocation7 [shape = 'u8[16384]{0}', space=vmem, size = 0x4000, scoped, tag = 'input window, operand 1']
    #allocation8 [shape = 's32[2]{0}', space=sflag, size = 0x8, scoped, tag = 'scoped memory for tpu_custom_call.1']
    #allocation9 [shape = 'u8[1024]{0}', space=vmem, size = 0x400, scoped, tag = 'output window, operand 0']
    #allocation10 [shape = 'u8[1024]{0}', space=vmem, size = 0x400, scoped, tag = 'output window, operand 1']
    #allocation11 [shape = 's32[2]{0}', space=sflag, size = 0x8, scoped, tag = 'scoped memory for tpu_custom_call.1']
    %9 = vsyncpa [#allocation5], 0
    %s10 = scalar_lea.sflag [#allocation5], 1
    %11 = vsyncpa %s10, 0
    %12 = vsyncpa [#allocation8], 0
    %s13 = scalar_lea.sflag [#allocation8], 1
    %14 = vsyncpa %s13, 0
    %15 = vsyncpa [#allocation6], 0
    %s16 = scalar_lea.sflag [#allocation6], 1
    %17 = vsyncpa %s16, 0
    %18 = vsyncpa [#allocation11], 0
    %s19 = scalar_lea.sflag [#allocation11], 1
    %20 = vsyncpa %s19, 0
    loop: start=0, step=1, limit=4
    $region2: #{tpu_custom_call.1} parent=1 // loop_pre_header
      _
    $region3: #{tpu_custom_call.1} parent=1 // loop_header
      %s22 = sphi 0, %s26
      %p23 = scmp.ge.s32.totalorder %s22, 4
      %s29 = sphi 0, %s41
      %s30 = sphi 0, %s37
      %s31 = sphi 0, %s29
      %s32 = sphi 0, %s30
      %s33 = sphi 0, %s31
      %s34 = sphi 0, %s32
      %s50 = sphi 0, %s52
      %s53 = sphi 0, %s50
      %s54 = sphi 0, %s53
      %s70 = sphi 0, %s54
      %s82 = sphi 0, %s84
      %s85 = sphi 0, %s82
      %s86 = sphi 0, %s85
      %s102 = sphi 0, %s86
      %s108 = sphi 0, %s110
      %s111 = sphi 0, %s108
      %s112 = sphi 0, %s111
      %s128 = sphi 0, %s112
      %s134 = sphi 0, %s136
      %s137 = sphi 0, %s134
      %s138 = sphi 0, %s137
      %s154 = sphi 0, %s138
    $region4: #{tpu_custom_call.1} parent=1 // loop_header_branch
      %25 = sbr.rel (%p23) target = $region8
    $region5: #{tpu_custom_call.1} parent=1 // loop_body
      %s27 = ssub.s32 %s22, 1
      %s28 = ssub.s32 %s22, 2
      %s35 = sadd.s32 1, %s30
      %p36 = scmp.ge.s32.totalorder %s35, 1
      %s37 = scalar_select %p36, 0, %s35
      %s38 = sadd.s32 1, %s29
      %s39 = scalar_select %p36, %s38, %s29
      %p40 = scmp.ge.s32.totalorder %s39, 2
      %s41 = scalar_select %p40, 0, %s39
      %s42 = sadd.s32 %s29, %s30
      %p43 = scmp.lt.s32.totalorder %s42, 0
      %s44 = scalar_select %p43, %s42, 0
      %s45 = sadd.s32 %s41, %s37
      %p46 = scmp.lt.s32.totalorder %s45, 0
      %s47 = scalar_select %p46, %s45, 0
      %s48 = ssub.s32 %s44, %s47
      %p49 = scmp.eq.s32.totalorder %s48, 0
      %s51 = sadd.s32 %s50, 1
      %s52 = scalar_select %p49, %s50, %s51
      %p55 = pneg %p49
      %p56 = scmp.eq.s32.totalorder %s22, 1
      %p57 = por %p55, %p56
      %p58 = scmp.ne.s32.totalorder %s50, %s53
      %p59 = scmp.eq.s32.totalorder %s22, 0
      %p60 = por %p58, %p59
      %p61 = scmp.ne.s32.totalorder %s50, %s53
      %p62 = scmp.eq.s32.totalorder %s27, 1
      %p63 = por %p61, %p62
      %p64 = scmp.ne.s32.totalorder %s53, %s54
      %p65 = scmp.eq.s32.totalorder %s27, 0
      %p66 = por %p64, %p65
      %p67 = scmp.ne.s32.totalorder %s53, %s54
      %p68 = scmp.eq.s32.totalorder %s28, 1
      %p69 = por %p67, %p68
      %p71 = scmp.ne.s32.totalorder %s54, %s70
      %p72 = scmp.eq.s32.totalorder %s28, 0
      %p73 = por %p71, %p72
      %s74 = sadd.s32 %s29, %s30
      %p75 = scmp.lt.s32.totalorder %s74, 0
      %s76 = scalar_select %p75, %s74, 0
      %s77 = sadd.s32 %s41, %s37
      %p78 = scmp.lt.s32.totalorder %s77, 0
      %s79 = scalar_select %p78, %s77, 0
      %s80 = ssub.s32 %s76, %s79
      %p81 = scmp.eq.s32.totalorder %s80, 0
      %s83 = sadd.s32 %s82, 1
      %s84 = scalar_select %p81, %s82, %s83
      %p87 = pneg %p81
      %p88 = scmp.eq.s32.totalorder %s22, 1
      %p89 = por %p87, %p88
      %p90 = scmp.ne.s32.totalorder %s82, %s85
      %p91 = scmp.eq.s32.totalorder %s22, 0
      %p92 = por %p90, %p91
      %p93 = scmp.ne.s32.totalorder %s82, %s85
      %p94 = scmp.eq.s32.totalorder %s27, 1
      %p95 = por %p93, %p94
      %p96 = scmp.ne.s32.totalorder %s85, %s86
      %p97 = scmp.eq.s32.totalorder %s27, 0
      %p98 = por %p96, %p97
      %p99 = scmp.ne.s32.totalorder %s85, %s86
      %p100 = scmp.eq.s32.totalorder %s28, 1
      %p101 = por %p99, %p100
      %p103 = scmp.ne.s32.totalorder %s86, %s102
      %p104 = scmp.eq.s32.totalorder %s28, 0
      %p105 = por %p103, %p104
      %s106 = ssub.s32 %s29, %s41
      %p107 = scmp.eq.s32.totalorder %s106, 0
      %s109 = sadd.s32 %s108, 1
      %s110 = scalar_select %p107, %s108, %s109
      %p113 = pneg %p107
      %p114 = scmp.eq.s32.totalorder %s22, 1
      %p115 = por %p113, %p114
      %p116 = scmp.ne.s32.totalorder %s108, %s111
      %p117 = scmp.eq.s32.totalorder %s22, 0
      %p118 = por %p116, %p117
      %p119 = scmp.ne.s32.totalorder %s108, %s111
      %p120 = scmp.eq.s32.totalorder %s27, 1
      %p121 = por %p119, %p120
      %p122 = scmp.ne.s32.totalorder %s111, %s112
      %p123 = scmp.eq.s32.totalorder %s27, 0
      %p124 = por %p122, %p123
      %p125 = scmp.ne.s32.totalorder %s111, %s112
      %p126 = scmp.eq.s32.totalorder %s28, 1
      %p127 = por %p125, %p126
      %p129 = scmp.ne.s32.totalorder %s112, %s128
      %p130 = scmp.eq.s32.totalorder %s28, 0
      %p131 = por %p129, %p130
      %s132 = ssub.s32 %s29, %s41
      %p133 = scmp.eq.s32.totalorder %s132, 0
      %s135 = sadd.s32 %s134, 1
      %s136 = scalar_select %p133, %s134, %s135
      %p139 = pneg %p133
      %p140 = scmp.eq.s32.totalorder %s22, 1
      %p141 = por %p139, %p140
      %p142 = scmp.ne.s32.totalorder %s134, %s137
      %p143 = scmp.eq.s32.totalorder %s22, 0
      %p144 = por %p142, %p143
      %p145 = scmp.ne.s32.totalorder %s134, %s137
      %p146 = scmp.eq.s32.totalorder %s27, 1
      %p147 = por %p145, %p146
      %p148 = scmp.ne.s32.totalorder %s137, %s138
      %p149 = scmp.eq.s32.totalorder %s27, 0
      %p150 = por %p148, %p149
      %p151 = scmp.ne.s32.totalorder %s137, %s138
      %p152 = scmp.eq.s32.totalorder %s28, 1
      %p153 = por %p151, %p152
      %p155 = scmp.ne.s32.totalorder %s138, %s154
      %p156 = scmp.eq.s32.totalorder %s28, 0
      %p157 = por %p155, %p156
      %p158 = scmp.le.s32.totalorder 1, %s22
      %p159 = scmp.lt.s32.totalorder %s22, 3
      %p160 = pnand %p158, %p159
      %p161 = pneg %p160
      // Predicated region
      $region9: #{tpu_custom_call.1} parent=5 // pred_check
        _
      $region10: #{tpu_custom_call.1} parent=5 // pred_check_branch
        %163 = sbr.rel (%p160) target = $region12
      $region11: #{tpu_custom_call.1} parent=5 // pred_region
        %s164 = ssub.s32 %s22, 1
      $region12: #{tpu_custom_call.1} parent=5 // pred_fallthru
        _
      %p165 = scmp.lt.s32.totalorder %s22, 2
      // Predicated region
      $region13: #{tpu_custom_call.1} parent=5 // pred_check
        %p166 = pneg %p165
      $region14: #{tpu_custom_call.1} parent=5 // pred_check_branch
        %168 = sbr.rel (%p166) target = $region16
      $region15: #{tpu_custom_call.1} parent=5 // pred_region
        // Predicated region
        $region17: #{tpu_custom_call.1} parent=15 // pred_check
          %p169 = pneg %p60
        $region18: #{tpu_custom_call.1} parent=15 // pred_check_branch
          %171 = sbr.rel (%p169) target = $region20
        $region19: #{tpu_custom_call.1} parent=15 // pred_region
          %s172 = sand.u32 %s50, 1
          %s173 = scalar_lea.sflag [#allocation5], %s172
          %s174 = sand.u32 %s50, 1
          %s175 = smul.addr %s174, 16
          %s176 = scalar_lea.vmem [#allocation4], %s175
          %s177 = sadd.s32 %s29, %s30
          %p178 = scmp.lt.s32.totalorder %s177, 0
          %s179 = scalar_select %p178, %s177, 0
          %s180 = smul.u32 2, %s179
          %s182 = ssub.s32 256, 256
          %183 = vsyncadd %s173, %s182
          %s184 = smul.addr %s180, 128
          %s185 = scalar_lea.hbm %s0, %s184
          %s186 = sshll.u32 %s176, 4
          %s187 = int_to_ptr.vmem [resolvable:$true] %s186
          %192 = dma.hbm_to_vmem [thread:$0]  %s185, 256, %s187, %s173, 128, 128, 8
        $region20: #{tpu_custom_call.1} parent=15 // pred_fallthru
          _
        // Predicated region
        $region21: #{tpu_custom_call.1} parent=15 // pred_check
          %p193 = pneg %p92
        $region22: #{tpu_custom_call.1} parent=15 // pred_check_branch
          %195 = sbr.rel (%p193) target = $region24
        $region23: #{tpu_custom_call.1} parent=15 // pred_region
          %s196 = sand.u32 %s82, 1
          %s197 = scalar_lea.sflag [#allocation8], %s196
          %s198 = sand.u32 %s82, 1
          %s199 = smul.addr %s198, 16
          %s200 = scalar_lea.vmem [#allocation7], %s199
          %s201 = sadd.s32 %s29, %s30
          %p202 = scmp.lt.s32.totalorder %s201, 0
          %s203 = scalar_select %p202, %s201, 0
          %s204 = smul.u32 2, %s203
          %s206 = ssub.s32 256, 256
          %207 = vsyncadd %s197, %s206
          %s208 = smul.addr %s204, 128
          %s209 = scalar_lea.hbm %s1, %s208
          %s210 = sshll.u32 %s200, 4
          %s211 = int_to_ptr.vmem [resolvable:$true] %s210
          %216 = dma.hbm_to_vmem [thread:$0]  %s209, 256, %s211, %s197, 128, 128, 8
        $region24: #{tpu_custom_call.1} parent=15 // pred_fallthru
          _
      $region16: #{tpu_custom_call.1} parent=5 // pred_fallthru
        _
      %p217 = scmp.le.s32.totalorder 1, %s22
      %p218 = scmp.lt.s32.totalorder %s22, 3
      %p219 = pnand %p217, %p218
      %p220 = pneg %p219
      // Predicated region
      $region25: #{tpu_custom_call.1} parent=5 // pred_check
        _
      $region26: #{tpu_custom_call.1} parent=5 // pred_check_branch
        %222 = sbr.rel (%p219) target = $region28
      $region27: #{tpu_custom_call.1} parent=5 // pred_region
        %s223 = ssub.s32 %s22, 1
        %s224 = sand.u32 %s53, 1
        %s225 = scalar_lea.sflag [#allocation5], %s224
        %s226 = sand.u32 %s53, 1
        %s227 = smul.addr %s226, 16
        %s228 = scalar_lea.vmem [#allocation4], %s227
        // Predicated region
        $region29: #{tpu_custom_call.1} parent=27 // pred_check
          %p229 = pneg %p66
        $region30: #{tpu_custom_call.1} parent=27 // pred_check_branch
          %231 = sbr.rel (%p229) target = $region32
        $region31: #{tpu_custom_call.1} parent=27 // pred_region
          %232 = dma.done %s225, 256
        $region32: #{tpu_custom_call.1} parent=27 // pred_fallthru
          _
        %s233 = sand.u32 %s85, 1
        %s234 = scalar_lea.sflag [#allocation8], %s233
        %s235 = sand.u32 %s85, 1
        %s236 = smul.addr %s235, 16
        %s237 = scalar_lea.vmem [#allocation7], %s236
        // Predicated region
        $region33: #{tpu_custom_call.1} parent=27 // pred_check
          %p238 = pneg %p98
        $region34: #{tpu_custom_call.1} parent=27 // pred_check_branch
          %240 = sbr.rel (%p238) target = $region36
        $region35: #{tpu_custom_call.1} parent=27 // pred_region
          %241 = dma.done %s234, 256
        $region36: #{tpu_custom_call.1} parent=27 // pred_fallthru
          _
        %s242 = sand.u32 %s53, 1
        %s243 = scalar_lea.sflag [#allocation5], %s242
        %s244 = sand.u32 %s53, 1
        %s245 = smul.addr %s244, 16
        %s246 = scalar_lea.vmem [#allocation4], %s245
        %p247 = pneg %p66
        %p248 = pneg %p63
        %s249 = sand.u32 %s85, 1
        %s250 = scalar_lea.sflag [#allocation8], %s249
        %s251 = sand.u32 %s85, 1
        %s252 = smul.addr %s251, 16
        %s253 = scalar_lea.vmem [#allocation7], %s252
        %p254 = pneg %p98
        %p255 = pneg %p95
        %p256 = pneg %p124
        %p257 = pneg %p121
        %s258 = sand.u32 %s111, 1
        %s259 = scalar_lea.sflag [#allocation6], %s258
        %s260 = sand.u32 %s111, 1
        %s261 = scalar_lea.vmem [#allocation9], %s260
        %p262 = pneg %p150
        %p263 = pneg %p147
        %s264 = sand.u32 %s137, 1
        %s265 = scalar_lea.sflag [#allocation11], %s264
        %s266 = sand.u32 %s137, 1
        %s267 = scalar_lea.vmem [#allocation10], %s266
        %s268 = sadd.s32 %s31, %s32
        %p269 = scmp.lt.s32.totalorder %s268, 0
        %s270 = scalar_select %p269, %s268, 0
        %s271 = smul.u32 2, %s270
        %s272 = sadd.s32 %s31, %s32
        %p273 = scmp.lt.s32.totalorder %s272, 0
        %s274 = scalar_select %p273, %s272, 0
        %s275 = smul.u32 2, %s274
        %p276 = scmp.eq.s32.totalorder %s32, 0
        // Predicated region
        $region37: #{tpu_custom_call.1} parent=27 // pred_check
          %p277 = pneg %p276
        $region38: #{tpu_custom_call.1} parent=27 // pred_check_branch
          %279 = sbr.rel (%p277) target = $region40
        $region39: #{tpu_custom_call.1} parent=27 // pred_region
          %280 = vst [vmem:[#allocation2] sm:$0xff] 0.0
          %281 = vst [vmem:[#allocation2 + $0x8] sm:$0xff] 0.0
          %282 = vst [vmem:[#allocation3] sm:$0xff] 0.0
          %283 = vst [vmem:[#allocation3 + $0x8] sm:$0xff] 0.0
        $region40: #{tpu_custom_call.1} parent=27 // pred_fallthru
          _
        %v284 = vld [vmem:[%s228] sm:$0xff]
        %v285 = vld [vmem:[%s228 + $0x8] sm:$0xff]
        %v286 = vld [vmem:[%s237] sm:$0xff]
        %v287 = vld [vmem:[%s237 + $0x8] sm:$0xff]
        %v288 = vmul.f32 %v284, %v286
        %v289 = vmul.f32 %v285, %v287
        %v290 = vmax.f32 %v288, 0.0
        %v291 = vmax.f32 %v289, 0.0
        %v292 = vmin.f32 %v290, 1.0
        %v293 = vmin.f32 %v291, 1.0
        %v294 = vround.ne.pseudo %v292
        %v295 = vround.ne.pseudo %v293
        %v296 = vmax.f32 %v284, 0.0
        %v297 = vmax.f32 %v285, 0.0
        %v298 = vmin.f32 %v296, 1.0
        %v299 = vmin.f32 %v297, 1.0
        %v300 = vround.ne.pseudo %v298
        %v301 = vround.ne.pseudo %v299
        %s302 = sadd.s32 %s31, %s32
        %s303 = smul.u32 %s302, 16
        %s304 = ssub.s32 16, %s303
        %v305 = vlaneseq
        %v306 = vshrl.u32 %v305, 7
        %v307 = vadd.s32 %v306, 8
        %v308 = vstv %s304
        %vm309 = vcmp.lt.s32.totalorder %v306, %v308
        %vm310 = vcmp.lt.s32.totalorder %v307, %v308
        %v311 = vsel %vm309, %v294, 0.0
        %v312 = vsel %vm310, %v295, 0.0
        %v313 = vsel %vm309, %v300, 0.0
        %v314 = vsel %vm310, %v301, 0.0
        %v315 = vld [vmem:[#allocation2] sm:$0xff]
        %v316 = vld [vmem:[#allocation2 + $0x8] sm:$0xff]
        %v317 = vadd.f32 %v315, %v311
        %v318 = vadd.f32 %v316, %v312
        %319 = vst [vmem:[#allocation2] sm:$0xff] %v317
        %320 = vst [vmem:[#allocation2 + $0x8] sm:$0xff] %v318
        %v321 = vld [vmem:[#allocation3] sm:$0xff]
        %v322 = vld [vmem:[#allocation3 + $0x8] sm:$0xff]
        %v323 = vadd.f32 %v321, %v313
        %v324 = vadd.f32 %v322, %v314
        %325 = vst [vmem:[#allocation3] sm:$0xff] %v323
        %326 = vst [vmem:[#allocation3 + $0x8] sm:$0xff] %v324
        // Predicated region
        $region41: #{tpu_custom_call.1} parent=27 // pred_check
          %p327 = pneg %p276
        $region42: #{tpu_custom_call.1} parent=27 // pred_check_branch
          %329 = sbr.rel (%p327) target = $region44
        $region43: #{tpu_custom_call.1} parent=27 // pred_region
          %v330 = vld [vmem:[#allocation2] sm:$0xff]
          %v331 = vld [vmem:[#allocation2 + $0x8] sm:$0xff]
          %v332 = vadd.f32 %v330, %v331
          %v333 = vrot.slane %v332, 4
          %v334 = vadd.f32 %v332, %v333
          %v335 = vrot.slane %v334, 2
          %v336 = vadd.f32 %v334, %v335
          %v337 = vrot.slane %v336, 1
          %v338 = vadd.f32 %v336, %v337
          %339 = vst [vmem:[%s261] sm:$0x1] %v338
          %v340 = vld [vmem:[#allocation3] sm:$0xff]
          %v341 = vld [vmem:[#allocation3 + $0x8] sm:$0xff]
          %v342 = vadd.f32 %v340, %v341
          %v343 = vrot.slane %v342, 4
          %v344 = vadd.f32 %v342, %v343
          %v345 = vrot.slane %v344, 2
          %v346 = vadd.f32 %v344, %v345
          %v347 = vrot.slane %v346, 1
          %v348 = vadd.f32 %v346, %v347
          %349 = vst [vmem:[%s267] sm:$0x1] %v348
        $region44: #{tpu_custom_call.1} parent=27 // pred_fallthru
          _
        %s350 = sand.u32 %s111, 1
        %s351 = scalar_lea.sflag [#allocation6], %s350
        %s352 = sand.u32 %s111, 1
        %s353 = scalar_lea.vmem [#allocation9], %s352
        %s354 = sand.u32 %s137, 1
        %s355 = scalar_lea.sflag [#allocation11], %s354
        %s356 = sand.u32 %s137, 1
        %s357 = scalar_lea.vmem [#allocation10], %s356
        // Predicated region
        $region45: #{tpu_custom_call.1} parent=27 // pred_check
          %p358 = pneg %p121
        $region46: #{tpu_custom_call.1} parent=27 // pred_check_branch
          %360 = sbr.rel (%p358) target = $region48
        $region47: #{tpu_custom_call.1} parent=27 // pred_region
          %s362 = ssub.s32 16, 16
          %363 = vsyncadd %s351, %s362
          %s364 = smul.addr %s31, 16
          %s365 = scalar_lea.hbm %s2, %s364
          %s367 = sshll.u32 %s353, 4
          %s368 = int_to_ptr.vmem [resolvable:$true] %s367
          %370 = dma.vmem_to_hbm [thread:$0]  %s368, 16, %s365, %s351
        $region48: #{tpu_custom_call.1} parent=27 // pred_fallthru
          _
        // Predicated region
        $region49: #{tpu_custom_call.1} parent=27 // pred_check
          %p371 = pneg %p147
        $region50: #{tpu_custom_call.1} parent=27 // pred_check_branch
          %373 = sbr.rel (%p371) target = $region52
        $region51: #{tpu_custom_call.1} parent=27 // pred_region
          %s375 = ssub.s32 16, 16
          %376 = vsyncadd %s355, %s375
          %s377 = smul.addr %s31, 16
          %s378 = scalar_lea.hbm %s3, %s377
          %s380 = sshll.u32 %s357, 4
          %s381 = int_to_ptr.vmem [resolvable:$true] %s380
          %383 = dma.vmem_to_hbm [thread:$0]  %s381, 16, %s378, %s355
        $region52: #{tpu_custom_call.1} parent=27 // pred_fallthru
          _
      $region28: #{tpu_custom_call.1} parent=5 // pred_fallthru
        _
      %p384 = scmp.le.s32.totalorder 2, %s22
      // Predicated region
      $region53: #{tpu_custom_call.1} parent=5 // pred_check
        %p385 = pneg %p384
      $region54: #{tpu_custom_call.1} parent=5 // pred_check_branch
        %387 = sbr.rel (%p385) target = $region56
      $region55: #{tpu_custom_call.1} parent=5 // pred_region
        %s388 = ssub.s32 %s22, 2
        // Predicated region
        $region57: #{tpu_custom_call.1} parent=55 // pred_check
          %p389 = pneg %p127
        $region58: #{tpu_custom_call.1} parent=55 // pred_check_branch
          %391 = sbr.rel (%p389) target = $region60
        $region59: #{tpu_custom_call.1} parent=55 // pred_region
          %s392 = sand.u32 %s112, 1
          %s393 = scalar_lea.sflag [#allocation6], %s392
          %s394 = sand.u32 %s112, 1
          %s395 = scalar_lea.vmem [#allocation9], %s394
          %396 = dma.done %s393, 16
        $region60: #{tpu_custom_call.1} parent=55 // pred_fallthru
          _
        // Predicated region
        $region61: #{tpu_custom_call.1} parent=55 // pred_check
          %p397 = pneg %p153
        $region62: #{tpu_custom_call.1} parent=55 // pred_check_branch
          %399 = sbr.rel (%p397) target = $region64
        $region63: #{tpu_custom_call.1} parent=55 // pred_region
          %s400 = sand.u32 %s138, 1
          %s401 = scalar_lea.sflag [#allocation11], %s400
          %s402 = sand.u32 %s138, 1
          %s403 = scalar_lea.vmem [#allocation10], %s402
          %404 = dma.done %s401, 16
        $region64: #{tpu_custom_call.1} parent=55 // pred_fallthru
          _
      $region56: #{tpu_custom_call.1} parent=5 // pred_fallthru
        _
    $region6: #{tpu_custom_call.1} parent=1 // loop_footer
      %s26 = sadd.s32 1, %s22
    $region7: #{tpu_custom_call.1} parent=1 // loop_footer_branch
      %21 = sbr.rel target = $region3
    $region8: #{tpu_custom_call.1} parent=1 // loop_exit
      _
    %405 = vsyncpa [#allocation5], 1
    %s406 = scalar_lea.sflag [#allocation5], 1
    %407 = vsyncpa %s406, 1
    %408 = vsyncpa [#allocation8], 1
    %s409 = scalar_lea.sflag [#allocation8], 1
    %410 = vsyncpa %s409, 1
    %411 = vsyncpa [#allocation6], 1
    %s412 = scalar_lea.sflag [#allocation6], 1
    %413 = vsyncpa %s412, 1
    %414 = vsyncpa [#allocation11], 1
    %s415 = scalar_lea.sflag [#allocation11], 1
    %416 = vsyncpa %s415, 1

</llo_original>
